<compile_context>
chip_gen: v7x
topology: tpu7x:2x2x1
jax: 0.10.0
libtpu: 0.0.40
codegen_flags: <defaults>
</compile_context>

<pallas_src>
import functools

import jax
import jax.numpy as jnp
from jax.experimental import pallas as pl
from jax.experimental.pallas import tpu as pltpu  # noqa: F401  (TPU-specific tuning hooks)

LANE = 128      # lane width: pad feature dims to multiples of this
SUBLANE = 8     # sublane width: pad node counts to multiples of this


def _round_up(n, m):
    return ((n + m - 1) // m) * m


def _pad2d(x, rows, cols):
    r, c = x.shape
    return jnp.pad(x, ((0, rows - r), (0, cols - c)))


def fused_sage_kernel(x_ref, *refs, n_layers):
    """All SAGEConv('mean') layers fused; intermediates stay in VMEM/vregs.

    refs = [adj_0, w_0, b_0, ..., adj_{L-1}, w_{L-1}, b_{L-1}, out_ref]
      adj_l : [dst_pad_l, src_pad_l]    mean-normalized, zero-padded adjacency
      w_l   : [2*fin_pad_l, fout_pad_l] == concat([W_self; W_neigh], axis=0), zero-padded
      b_l   : [1, fout_pad_l]           zero-padded bias
    """
    out_ref = refs[-1]
    h = x_ref[...]                                    # [src_pad_0, fin_pad_0] f32
    for l in range(n_layers):
        adj = refs[3 * l][...]
        w = refs[3 * l + 1][...]
        b = refs[3 * l + 2][...]
        n_dst = adj.shape[0]
        # mean neighborhood aggregation (MXU); padded adj rows/cols are zero.
        h_neigh = jnp.dot(adj, h, preferred_element_type=jnp.float32)
        # dst nodes are a prefix of src nodes (DGL block convention); sublane-aligned slice.
        h_dst = h[:n_dst, :]
        # single fused projection: [n_dst, 2F] @ [2F, Fout]  (one MXU dot instead of two + add);
        # the concat boundary is a multiple of 128 lanes, so no relayout is required.
        cat = jnp.concatenate([h_dst, h_neigh], axis=-1)
        h = jnp.dot(cat, w, preferred_element_type=jnp.float32) + b
        if l != n_layers - 1:
            h = jnp.maximum(h, 0.0)                   # ReLU; dropout = identity (eval mode)
    out_ref[...] = h.astype(out_ref.dtype)


def sage_forward(blocks_adj, x, params):
    """blocks_adj: list of [num_dst, num_src] mean-normalized dense block adjacencies.
       x: [num_src_0, in_feats] input features.
       params: list of (w_self [fin,fout], w_neigh [fin,fout], bias [fout]) per layer."""
    n_layers = len(params)

    feat_real = [x.shape[1]] + [w_self.shape[1] for (w_self, _, _) in params]
    feat_pad = [_round_up(f, LANE) for f in feat_real]
    dst_real = [adj.shape[0] for adj in blocks_adj]
    src_real = [adj.shape[1] for adj in blocks_adj]
    dst_pad = [_round_up(d, SUBLANE) for d in dst_real]
    src_pad = [_round_up(s, SUBLANE) for s in src_real]

    # ---- pad everything once (lane-dense / sublane-aligned), concat weights ----
    inputs = [_pad2d(x.astype(jnp.float32), src_pad[0], feat_pad[0])]
    flops = 0
    for l, (adj, (w_self, w_neigh, bias)) in enumerate(zip(blocks_adj, params)):
        fin_p, fout_p = feat_pad[l], feat_pad[l + 1]
        adj_p = _pad2d(adj.astype(jnp.float32), dst_pad[l], src_pad[l])
        w_cat = jnp.concatenate(
            [_pad2d(w_self.astype(jnp.float32), fin_p, fout_p),
             _pad2d(w_neigh.astype(jnp.float32), fin_p, fout_p)], axis=0)
        b_p = _pad2d(bias.reshape(1, -1).astype(jnp.float32), 1, fout_p)
        inputs += [adj_p, w_cat, b_p]
        flops += 2 * dst_pad[l] * src_pad[l] * fin_p          # adj @ h
        flops += 2 * dst_pad[l] * (2 * fin_p) * fout_p        # cat @ W

    out_rows, out_cols = dst_pad[-1], feat_pad[-1]
    bytes_accessed = sum(int(a.size) * a.dtype.itemsize for a in inputs) + out_rows * out_cols * 4

    full = lambda a: pl.BlockSpec(a.shape, lambda: (0,) * a.ndim)

    out = pl.pallas_call(
        functools.partial(fused_sage_kernel, n_layers=n_layers),
        out_shape=jax.ShapeDtypeStruct((out_rows, out_cols), jnp.float32),
        grid=(),
        in_specs=[full(a) for a in inputs],
        out_specs=pl.BlockSpec((out_rows, out_cols), lambda: (0, 0)),
        cost_estimate=pl.CostEstimate(
            flops=flops, transcendentals=0, bytes_accessed=bytes_accessed),
    )(*inputs)

    # slice the real result back out of the padded slab
    return out[:dst_real[-1], :feat_real[-1]]


def sage_forward_ref(blocks_adj, x, params):
    """Pure-JAX reference for correctness checking (unpadded)."""
    h = x
    n_layers = len(params)
    for l, (adj, (w_self, w_neigh, bias)) in enumerate(zip(blocks_adj, params)):
        h_neigh = adj @ h
        h_dst = h[: adj.shape[0], :]
        h = h_dst @ w_self + h_neigh @ w_neigh + bias
        if l != n_layers - 1:
            h = jnp.maximum(h, 0.0)
    return h


def make_mean_adj(key, num_dst, num_src, p=0.3):
    """Random dense block adjacency with mean normalization; every dst gets >=1 neighbor."""
    a = (jax.random.uniform(key, (num_dst, num_src)) < p).astype(jnp.float32)
    # guarantee at least one in-neighbor per dst node (self edge: dst i == src i)
    a = a.at[jnp.arange(num_dst), jnp.arange(num_dst)].set(1.0)
    deg = jnp.sum(a, axis=1, keepdims=True)
    return a / jnp.maximum(deg, 1.0)


if __name__ == "__main__":
    key = jax.random.PRNGKey(0)

    # model config (small, consistent with SAGE.__init__)
    in_feats, n_hidden, n_classes, n_layers = 16, 32, 8, 3

    # block (message-flow-graph) node counts per layer: src shrinks toward the output
    src_sizes = [64, 32, 16]
    dst_sizes = [32, 16, 8]
    feat_sizes = [in_feats, n_hidden, n_hidden, n_classes]

    # deterministic parameter init (SAGEConv 'mean': fc_self, fc_neigh, bias per layer)
    params = []
    for l in range(n_layers):
        key, k1, k2 = jax.random.split(key, 3)
        fin, fout = feat_sizes[l], feat_sizes[l + 1]
        scale = 1.0 / jnp.sqrt(jnp.float32(fin))
        w_self = jax.random.uniform(k1, (fin, fout), jnp.float32, -scale, scale)
        w_neigh = jax.random.uniform(k2, (fin, fout), jnp.float32, -scale, scale)
        bias = jnp.zeros((fout,), jnp.float32)
        params.append((w_self, w_neigh, bias))

    # deterministic blocks + input features
    blocks_adj = []
    for l in range(n_layers):
        key, ka = jax.random.split(key)
        blocks_adj.append(make_mean_adj(ka, dst_sizes[l], src_sizes[l]))
    key, kx = jax.random.split(key)
    x = jax.random.normal(kx, (src_sizes[0], in_feats), jnp.float32)

    # jit the full forward so host-side padding / weight-concat fuses with the kernel call
    sage_forward_jit = jax.jit(sage_forward)

    out = sage_forward_jit(blocks_adj, x, params)
    out = jax.block_until_ready(out)

    ref = sage_forward_ref(blocks_adj, x, params)
    assert out.shape == (dst_sizes[-1], n_classes), out.shape
    assert jnp.allclose(out, ref, atol=1e-4, rtol=1e-4), "mismatch vs reference"

    print("KERNEL_OK")
</pallas_src>

<mosaic_0001>
module attributes {stable_mosaic.version = 11 : i64} {
  func.func @fused_sage_kernel(%arg0: memref<64x128xf32, #tpu.memory_space<vmem>>, %arg1: memref<32x64xf32, #tpu.memory_space<vmem>>, %arg2: memref<256x128xf32, #tpu.memory_space<vmem>>, %arg3: memref<1x128xf32, #tpu.memory_space<vmem>>, %arg4: memref<16x32xf32, #tpu.memory_space<vmem>>, %arg5: memref<256x128xf32, #tpu.memory_space<vmem>>, %arg6: memref<1x128xf32, #tpu.memory_space<vmem>>, %arg7: memref<8x16xf32, #tpu.memory_space<vmem>>, %arg8: memref<256x128xf32, #tpu.memory_space<vmem>>, %arg9: memref<1x128xf32, #tpu.memory_space<vmem>>, %arg10: memref<8x128xf32, #tpu.memory_space<vmem>>) attributes {dimension_semantics = [], scalar_prefetch = 0 : i64, scratch_operands = 0 : i64, tpu.core_type = #tpu.core_type<tc>} {
    %c0 = arith.constant 0 : index
    %c0_0 = arith.constant 0 : index
    %0 = vector.load %arg0[%c0, %c0_0] : memref<64x128xf32, #tpu.memory_space<vmem>>, vector<64x128xf32>
    %c0_1 = arith.constant 0 : index
    %c0_2 = arith.constant 0 : index
    %1 = vector.load %arg1[%c0_1, %c0_2] : memref<32x64xf32, #tpu.memory_space<vmem>>, vector<32x64xf32>
    %c0_3 = arith.constant 0 : index
    %c0_4 = arith.constant 0 : index
    %2 = vector.load %arg2[%c0_3, %c0_4] : memref<256x128xf32, #tpu.memory_space<vmem>>, vector<256x128xf32>
    %c0_5 = arith.constant 0 : index
    %c0_6 = arith.constant 0 : index
    %3 = vector.load %arg3[%c0_5, %c0_6] : memref<1x128xf32, #tpu.memory_space<vmem>>, vector<1x128xf32>
    %cst = arith.constant dense<0.000000e+00> : vector<32x128xf32>
    %4 = tpu.matmul %1, %0, %cst {dimension_numbers = #tpu.dot_dimension_numbers<[1], [0], [0], [1], [0, 0, 1, 1], [], []>} : vector<32x64xf32>, vector<64x128xf32>, vector<32x128xf32> -> vector<32x128xf32>
    %5 = vector.extract_strided_slice %0 {offsets = [0, 0], sizes = [32, 128], strides = [1, 1]} : vector<64x128xf32> to vector<32x128xf32>
    %6 = tpu.concatenate %5, %4 in 1 : vector<32x128xf32>, vector<32x128xf32> -> vector<32x256xf32>
    %cst_7 = arith.constant dense<0.000000e+00> : vector<32x128xf32>
    %7 = tpu.matmul %6, %2, %cst_7 {dimension_numbers = #tpu.dot_dimension_numbers<[1], [0], [0], [1], [0, 0, 1, 1], [], []>} : vector<32x256xf32>, vector<256x128xf32>, vector<32x128xf32> -> vector<32x128xf32>
    %8 = vector.broadcast %3 : vector<1x128xf32> to vector<32x128xf32>
    %9 = arith.addf %7, %8 : vector<32x128xf32>
    %cst_8 = arith.constant 0.000000e+00 : f32
    %10 = vector.broadcast %cst_8 : f32 to vector<32x128xf32>
    %11 = arith.maximumf %9, %10 : vector<32x128xf32>
    %c0_9 = arith.constant 0 : index
    %c0_10 = arith.constant 0 : index
    %12 = vector.load %arg4[%c0_9, %c0_10] : memref<16x32xf32, #tpu.memory_space<vmem>>, vector<16x32xf32>
    %c0_11 = arith.constant 0 : index
    %c0_12 = arith.constant 0 : index
    %13 = vector.load %arg5[%c0_11, %c0_12] : memref<256x128xf32, #tpu.memory_space<vmem>>, vector<256x128xf32>
    %c0_13 = arith.constant 0 : index
    %c0_14 = arith.constant 0 : index
    %14 = vector.load %arg6[%c0_13, %c0_14] : memref<1x128xf32, #tpu.memory_space<vmem>>, vector<1x128xf32>
    %cst_15 = arith.constant dense<0.000000e+00> : vector<16x128xf32>
    %15 = tpu.matmul %12, %11, %cst_15 {dimension_numbers = #tpu.dot_dimension_numbers<[1], [0], [0], [1], [0, 0, 1, 1], [], []>} : vector<16x32xf32>, vector<32x128xf32>, vector<16x128xf32> -> vector<16x128xf32>
    %16 = vector.extract_strided_slice %11 {offsets = [0, 0], sizes = [16, 128], strides = [1, 1]} : vector<32x128xf32> to vector<16x128xf32>
    %17 = tpu.concatenate %16, %15 in 1 : vector<16x128xf32>, vector<16x128xf32> -> vector<16x256xf32>
    %cst_16 = arith.constant dense<0.000000e+00> : vector<16x128xf32>
    %18 = tpu.matmul %17, %13, %cst_16 {dimension_numbers = #tpu.dot_dimension_numbers<[1], [0], [0], [1], [0, 0, 1, 1], [], []>} : vector<16x256xf32>, vector<256x128xf32>, vector<16x128xf32> -> vector<16x128xf32>
    %19 = vector.broadcast %14 : vector<1x128xf32> to vector<16x128xf32>
    %20 = arith.addf %18, %19 : vector<16x128xf32>
    %cst_17 = arith.constant 0.000000e+00 : f32
    %21 = vector.broadcast %cst_17 : f32 to vector<16x128xf32>
    %22 = arith.maximumf %20, %21 : vector<16x128xf32>
    %c0_18 = arith.constant 0 : index
    %c0_19 = arith.constant 0 : index
    %23 = vector.load %arg7[%c0_18, %c0_19] : memref<8x16xf32, #tpu.memory_space<vmem>>, vector<8x16xf32>
    %c0_20 = arith.constant 0 : index
    %c0_21 = arith.constant 0 : index
    %24 = vector.load %arg8[%c0_20, %c0_21] : memref<256x128xf32, #tpu.memory_space<vmem>>, vector<256x128xf32>
    %c0_22 = arith.constant 0 : index
    %c0_23 = arith.constant 0 : index
    %25 = vector.load %arg9[%c0_22, %c0_23] : memref<1x128xf32, #tpu.memory_space<vmem>>, vector<1x128xf32>
    %cst_24 = arith.constant dense<0.000000e+00> : vector<8x128xf32>
    %26 = tpu.matmul %23, %22, %cst_24 {dimension_numbers = #tpu.dot_dimension_numbers<[1], [0], [0], [1], [0, 0, 1, 1], [], []>} : vector<8x16xf32>, vector<16x128xf32>, vector<8x128xf32> -> vector<8x128xf32>
    %27 = vector.extract_strided_slice %22 {offsets = [0, 0], sizes = [8, 128], strides = [1, 1]} : vector<16x128xf32> to vector<8x128xf32>
    %28 = tpu.concatenate %27, %26 in 1 : vector<8x128xf32>, vector<8x128xf32> -> vector<8x256xf32>
    %cst_25 = arith.constant dense<0.000000e+00> : vector<8x128xf32>
    %29 = tpu.matmul %28, %24, %cst_25 {dimension_numbers = #tpu.dot_dimension_numbers<[1], [0], [0], [1], [0, 0, 1, 1], [], []>} : vector<8x256xf32>, vector<256x128xf32>, vector<8x128xf32> -> vector<8x128xf32>
    %30 = vector.broadcast %25 : vector<1x128xf32> to vector<8x128xf32>
    %31 = arith.addf %29, %30 : vector<8x128xf32>
    %c0_26 = arith.constant 0 : index
    %c0_27 = arith.constant 0 : index
    %32 = vector.load %arg10[%c0_26, %c0_27] : memref<8x128xf32, #tpu.memory_space<vmem>>, vector<8x128xf32>
    tpu.vector_store %arg10[%c0_26, %c0_27], %31 {strides = array<i32>} : memref<8x128xf32, #tpu.memory_space<vmem>>, vector<8x128xf32>,
    return
  }
}

</mosaic_0001>

<llo_original>
// kernel: sage_forward.1
$region0: #{sage_forward.1}
  #allocation0 [shape = 'u32[]', space=smem, size = 0x4, offset = 0x4, fixed_abs, tag = 'smem constant byte address 0x4 - core index']
  #allocation1 [shape = 'u32[144,128]{1,0:T(1,128)}', space=vmem, size = 0x12000, scoped, tag = 'internal scratch']
  %s0 = inlined_call_operand.vmem [shape: f32[64,128], index: 0, kind: input, shape index: {}]
  %s1 = inlined_call_operand.vmem [shape: f32[32,64], index: 1, kind: input, shape index: {}]
  %s2 = inlined_call_operand.vmem [shape: f32[256,128], index: 2, kind: input, shape index: {}]
  %s3 = inlined_call_operand.vmem [shape: f32[1,128], index: 3, kind: input, shape index: {}]
  %s4 = inlined_call_operand.vmem [shape: f32[16,32], index: 4, kind: input, shape index: {}]
  %s5 = inlined_call_operand.vmem [shape: f32[256,128], index: 5, kind: input, shape index: {}]
  %s6 = inlined_call_operand.vmem [shape: f32[1,128], index: 6, kind: input, shape index: {}]
  %s7 = inlined_call_operand.vmem [shape: f32[8,16], index: 7, kind: input, shape index: {}]
  %s8 = inlined_call_operand.vmem [shape: f32[256,128], index: 8, kind: input, shape index: {}]
  %s9 = inlined_call_operand.vmem [shape: f32[1,128], index: 9, kind: input, shape index: {}]
  %s10 = inlined_call_operand.hbm [shape: f32[8,128], index: 10, kind: output, shape index: {}]
  %s11 = sld [smem:[#allocation0]]
  $region50: #{sage_forward.1} parent=0
    _
  %s13 = ssub.s32 1, %s11
  %s14 = scalar_select 0, %s13, %s11
  $region1: #{sage_forward.1} parent=0
    #allocation2 [shape = 'u8[4096]{0}', space=vmem, size = 0x1000, scoped, tag = 'output window, operand 0, single buffered']
    #allocation3 [shape = 's32[1]{0}', space=sflag, size = 0x4, scoped, tag = 'scoped memory for sage_forward.1']
    %15 = vsyncpa [#allocation3], 0
    // Predicated region
    $region2: #{sage_forward.1} parent=1 // pred_check
      _
    $region3: #{sage_forward.1} parent=1 // pred_check_branch
      %17 = sbr.rel (0) target = $region5
    $region4: #{sage_forward.1} parent=1 // pred_region
      _
    $region5: #{sage_forward.1} parent=1 // pred_fallthru
      _
    // Predicated region
    $region6: #{sage_forward.1} parent=1 // pred_check
      _
    $region7: #{sage_forward.1} parent=1 // pred_check_branch
      %19 = sbr.rel (0) target = $region9
    $region8: #{sage_forward.1} parent=1 // pred_region
      _
    $region9: #{sage_forward.1} parent=1 // pred_fallthru
      _
    // Predicated region
    $region10: #{sage_forward.1} parent=1 // pred_check
      _
    $region11: #{sage_forward.1} parent=1 // pred_check_branch
      %21 = sbr.rel (0) target = $region13
    $region12: #{sage_forward.1} parent=1 // pred_region
      _
    $region13: #{sage_forward.1} parent=1 // pred_fallthru
      _
    // Predicated region
    $region14: #{sage_forward.1} parent=1 // pred_check
      _
    $region15: #{sage_forward.1} parent=1 // pred_check_branch
      %23 = sbr.rel (0) target = $region17
    $region16: #{sage_forward.1} parent=1 // pred_region
      _
    $region17: #{sage_forward.1} parent=1 // pred_fallthru
      _
    // Predicated region
    $region18: #{sage_forward.1} parent=1 // pred_check
      _
    $region19: #{sage_forward.1} parent=1 // pred_check_branch
      %25 = sbr.rel (0) target = $region21
    $region20: #{sage_forward.1} parent=1 // pred_region
      _
    $region21: #{sage_forward.1} parent=1 // pred_fallthru
      _
    // Predicated region
    $region22: #{sage_forward.1} parent=1 // pred_check
      _
    $region23: #{sage_forward.1} parent=1 // pred_check_branch
      %27 = sbr.rel (0) target = $region25
    $region24: #{sage_forward.1} parent=1 // pred_region
      _
    $region25: #{sage_forward.1} parent=1 // pred_fallthru
      _
    // Predicated region
    $region26: #{sage_forward.1} parent=1 // pred_check
      _
    $region27: #{sage_forward.1} parent=1 // pred_check_branch
      %29 = sbr.rel (0) target = $region29
    $region28: #{sage_forward.1} parent=1 // pred_region
      _
    $region29: #{sage_forward.1} parent=1 // pred_fallthru
      _
    // Predicated region
    $region30: #{sage_forward.1} parent=1 // pred_check
      _
    $region31: #{sage_forward.1} parent=1 // pred_check_branch
      %31 = sbr.rel (0) target = $region33
    $region32: #{sage_forward.1} parent=1 // pred_region
      _
    $region33: #{sage_forward.1} parent=1 // pred_fallthru
      _
    // Predicated region
    $region34: #{sage_forward.1} parent=1 // pred_check
      _
    $region35: #{sage_forward.1} parent=1 // pred_check_branch
      %33 = sbr.rel (0) target = $region37
    $region36: #{sage_forward.1} parent=1 // pred_region
      _
    $region37: #{sage_forward.1} parent=1 // pred_fallthru
      _
    // Predicated region
    $region38: #{sage_forward.1} parent=1 // pred_check
      _
    $region39: #{sage_forward.1} parent=1 // pred_check_branch
      %35 = sbr.rel (0) target = $region41
    $region40: #{sage_forward.1} parent=1 // pred_region
      _
    $region41: #{sage_forward.1} parent=1 // pred_fallthru
      _
    %v36 = vld [vmem:[%s0] sm:$0xff]
    %v37 = vld [vmem:[%s0 + $0x8] sm:$0xff]
    %v38 = vld [vmem:[%s0 + $0x10] sm:$0xff]
    %v39 = vld [vmem:[%s0 + $0x18] sm:$0xff]
    %v40 = vld [vmem:[%s0 + $0x20] sm:$0xff]
    %v41 = vld [vmem:[%s0 + $0x28] sm:$0xff]
    %v42 = vld [vmem:[%s0 + $0x30] sm:$0xff]
    %v43 = vld [vmem:[%s0 + $0x38] sm:$0xff]
    %v44 = vld [vmem:[%s1] sm:$0xff]
    %v45 = vld [vmem:[%s1 + $0x8] sm:$0xff]
    %v46 = vld [vmem:[%s1 + $0x10] sm:$0xff]
    %v47 = vld [vmem:[%s1 + $0x18] sm:$0xff]
    %v48 = vld [vmem:[%s2] sm:$0xff]
    %v49 = vld [vmem:[%s2 + $0x8] sm:$0xff]
    %v50 = vld [vmem:[%s2 + $0x10] sm:$0xff]
    %v51 = vld [vmem:[%s2 + $0x18] sm:$0xff]
    %v52 = vld [vmem:[%s2 + $0x20] sm:$0xff]
    %v53 = vld [vmem:[%s2 + $0x28] sm:$0xff]
    %v54 = vld [vmem:[%s2 + $0x30] sm:$0xff]
    %v55 = vld [vmem:[%s2 + $0x38] sm:$0xff]
    %v56 = vld [vmem:[%s2 + $0x40] sm:$0xff]
    %v57 = vld [vmem:[%s2 + $0x48] sm:$0xff]
    %v58 = vld [vmem:[%s2 + $0x50] sm:$0xff]
    %v59 = vld [vmem:[%s2 + $0x58] sm:$0xff]
    %v60 = vld [vmem:[%s2 + $0x60] sm:$0xff]
    %v61 = vld [vmem:[%s2 + $0x68] sm:$0xff]
    %v62 = vld [vmem:[%s2 + $0x70] sm:$0xff]
    %v63 = vld [vmem:[%s2 + $0x78] sm:$0xff]
    %v64 = vld [vmem:[%s2 + $0x80] sm:$0xff]
    %v65 = vld [vmem:[%s2 + $0x88] sm:$0xff]
    %v66 = vld [vmem:[%s2 + $0x90] sm:$0xff]
    %v67 = vld [vmem:[%s2 + $0x98] sm:$0xff]
    %v68 = vld [vmem:[%s2 + $0xa0] sm:$0xff]
    %v69 = vld [vmem:[%s2 + $0xa8] sm:$0xff]
    %v70 = vld [vmem:[%s2 + $0xb0] sm:$0xff]
    %v71 = vld [vmem:[%s2 + $0xb8] sm:$0xff]
    %v72 = vld [vmem:[%s2 + $0xc0] sm:$0xff]
    %v73 = vld [vmem:[%s2 + $0xc8] sm:$0xff]
    %v74 = vld [vmem:[%s2 + $0xd0] sm:$0xff]
    %v75 = vld [vmem:[%s2 + $0xd8] sm:$0xff]
    %v76 = vld [vmem:[%s2 + $0xe0] sm:$0xff]
    %v77 = vld [vmem:[%s2 + $0xe8] sm:$0xff]
    %v78 = vld [vmem:[%s2 + $0xf0] sm:$0xff]
    %v79 = vld [vmem:[%s2 + $0xf8] sm:$0xff]
    %v80 = vld [vmem:[%s3] sm:$0x1]
    %vm81 = vcmask 523264
    %v83 = vsel %vm81, %v44, 0
    %v86 = vsel %vm81, %v45, 0
    %v89 = vsel %vm81, %v46, 0
    %v92 = vsel %vm81, %v47, 0
    %94 = vmatprep.subr.mxu0 0.0
    %95 = vmatpush1.msra.mxu0 %v36
    %96 = vmatprep.subr.mxu0 0.0
    %97 = vmatpush1.msra.mxu0 %v37
    %98 = vmatprep.subr.mxu0 0.0
    %99 = vmatpush1.msra.mxu0 %v38
    %100 = vmatprep.subr.mxu0 0.0
    %101 = vmatpush1.msra.mxu0 %v39
    %102 = vmatprep.subr.mxu0 0.0
    %103 = vmatpush1.msra.mxu0 %v40
    %104 = vmatprep.subr.mxu0 0.0
    %105 = vmatpush1.msra.mxu0 %v41
    %106 = vmatprep.subr.mxu0 0.0
    %107 = vmatpush1.msra.mxu0 %v42
    %108 = vmatprep.subr.mxu0 0.0
    %109 = vmatpush1.msra.mxu0 %v43
    %110 = vmatprep.subr.mxu0 0.0
    %111 = vmatpush1.msra.mxu0 0.0
    %112 = vmatprep.subr.mxu0 0.0
    %113 = vmatpush1.msra.mxu0 0.0
    %114 = vmatprep.subr.mxu0 0.0
    %115 = vmatpush1.msra.mxu0 0.0
    %116 = vmatprep.subr.mxu0 0.0
    %117 = vmatpush1.msra.mxu0 0.0
    %118 = vmatprep.subr.mxu0 0.0
    %119 = vmatpush1.msra.mxu0 0.0
    %120 = vmatprep.subr.mxu0 0.0
    %121 = vmatpush1.msra.mxu0 0.0
    %122 = vmatprep.subr.mxu0 0.0
    %123 = vmatpush1.msra.mxu0 0.0
    %124 = vmatprep.subr.mxu0 0.0
    %125 = vmatpush1.msra.mxu0 0.0
    %126 = vmatprep.subr.mxu0 0.0
    %127 = vmatpush1.msra.mxu0 0.0
    %128 = vmatprep.subr.mxu0 0.0
    %129 = vmatpush1.msra.mxu0 0.0
    %130 = vmatprep.subr.mxu0 0.0
    %131 = vmatpush1.msra.mxu0 0.0
    %132 = vmatprep.subr.mxu0 0.0
    %133 = vmatpush1.msra.mxu0 0.0
    %134 = vmatprep.subr.mxu0 0.0
    %135 = vmatpush1.msra.mxu0 0.0
    %136 = vmatprep.subr.mxu0 0.0
    %137 = vmatpush1.msra.mxu0 0.0
    %138 = vmatprep.subr.mxu0 0.0
    %139 = vmatpush1.msra.mxu0 0.0
    %140 = vmatprep.subr.mxu0 0.0
    %141 = vmatpush1.msra.mxu0 0.0
    %142 = vmatprep.subr.mxu0 0.0
    %143 = vmatpush1.msra.mxu0 0.0
    %144 = vmatprep.subr.mxu0 0.0
    %145 = vmatpush1.msra.mxu0 0.0
    %146 = vmatprep.subr.mxu0 0.0
    %147 = vmatpush1.msra.mxu0 0.0
    %148 = vmatprep.subr.mxu0 0.0
    %149 = vmatpush1.msra.mxu0 0.0
    %150 = vmatprep.subr.mxu0 0.0
    %151 = vmatpush1.msra.mxu0 0.0
    %152 = vmatprep.subr.mxu0 0.0
    %153 = vmatpush1.msra.mxu0 0.0
    %154 = vmatprep.subr.mxu0 0.0
    %155 = vmatpush1.msra.mxu0 0.0
    %156 = vmatprep.subr.mxu0 0.0
    %157 = vmatpush1.msra.mxu0 0.0
    %158 = vmatprep.mubr.f32.mxu0 0.0
    %159 = vmatmul.mubr.f32.gmra.mrb[0].mxu0 %v83
    %v160 = vpop.f32.mrb[0].mxu0
    %v161 = vadd.f32 0.0, %v160
    %v162 = vpop.f32.mrb[0].mxu0
    %163 = vmatprep.mubr.f32.mxu0 0.0
    %164 = vmatmul.mubr.f32.gmra.mrb[0].mxu0 %v86
    %v165 = vpop.f32.mrb[0].mxu0
    %v166 = vadd.f32 0.0, %v165
    %v167 = vpop.f32.mrb[0].mxu0
    %168 = vmatprep.mubr.f32.mxu0 0.0
    %169 = vmatmul.mubr.f32.gmra.mrb[0].mxu0 %v89
    %v170 = vpop.f32.mrb[0].mxu0
    %v171 = vadd.f32 0.0, %v170
    %v172 = vpop.f32.mrb[0].mxu0
    %173 = vmatprep.mubr.f32.mxu0 0.0
    %174 = vmatmul.mubr.f32.gmra.mrb[0].mxu0 %v92
    %v175 = vpop.f32.mrb[0].mxu0
    %v176 = vadd.f32 0.0, %v175
    %v177 = vpop.f32.mrb[0].mxu0
    %178 = vdwg.mxu0
    %v180 = vlaneseq
    %v181 = vshrl.u32 %v180, 7
    %v182 = vsub.s32 0, %v181
    %v183 = vrot.slane %v80, %v182
    %185 = vmatprep.subr.mxu0 0.0
    %186 = vmatpush1.msra.mxu0 %v48
    %187 = vmatprep.subr.mxu0 0.0
    %188 = vmatpush1.msra.mxu0 %v49
    %189 = vmatprep.subr.mxu0 0.0
    %190 = vmatpush1.msra.mxu0 %v50
    %191 = vmatprep.subr.mxu0 0.0
    %192 = vmatpush1.msra.mxu0 %v51
    %193 = vmatprep.subr.mxu0 0.0
    %194 = vmatpush1.msra.mxu0 %v52
    %195 = vmatprep.subr.mxu0 0.0
    %196 = vmatpush1.msra.mxu0 %v53
    %197 = vmatprep.subr.mxu0 0.0
    %198 = vmatpush1.msra.mxu0 %v54
    %199 = vmatprep.subr.mxu0 0.0
    %200 = vmatpush1.msra.mxu0 %v55
    %201 = vmatprep.subr.mxu0 0.0
    %202 = vmatpush1.msra.mxu0 %v56
    %203 = vmatprep.subr.mxu0 0.0
    %204 = vmatpush1.msra.mxu0 %v57
    %205 = vmatprep.subr.mxu0 0.0
    %206 = vmatpush1.msra.mxu0 %v58
    %207 = vmatprep.subr.mxu0 0.0
    %208 = vmatpush1.msra.mxu0 %v59
    %209 = vmatprep.subr.mxu0 0.0
    %210 = vmatpush1.msra.mxu0 %v60
    %211 = vmatprep.subr.mxu0 0.0
    %212 = vmatpush1.msra.mxu0 %v61
    %213 = vmatprep.subr.mxu0 0.0
    %214 = vmatpush1.msra.mxu0 %v62
    %215 = vmatprep.subr.mxu0 0.0
    %216 = vmatpush1.msra.mxu0 %v63
    %217 = vmatprep.subr.mxu0 0.0
    %218 = vmatpush1.msra.mxu0 %v64
    %219 = vmatprep.subr.mxu0 0.0
    %220 = vmatpush1.msra.mxu0 %v65
    %221 = vmatprep.subr.mxu0 0.0
    %222 = vmatpush1.msra.mxu0 %v66
    %223 = vmatprep.subr.mxu0 0.0
    %224 = vmatpush1.msra.mxu0 %v67
    %225 = vmatprep.subr.mxu0 0.0
    %226 = vmatpush1.msra.mxu0 %v68
    %227 = vmatprep.subr.mxu0 0.0
    %228 = vmatpush1.msra.mxu0 %v69
    %229 = vmatprep.subr.mxu0 0.0
    %230 = vmatpush1.msra.mxu0 %v70
    %231 = vmatprep.subr.mxu0 0.0
    %232 = vmatpush1.msra.mxu0 %v71
    %233 = vmatprep.subr.mxu0 0.0
    %234 = vmatpush1.msra.mxu0 %v72
    %235 = vmatprep.subr.mxu0 0.0
    %236 = vmatpush1.msra.mxu0 %v73
    %237 = vmatprep.subr.mxu0 0.0
    %238 = vmatpush1.msra.mxu0 %v74
    %239 = vmatprep.subr.mxu0 0.0
    %240 = vmatpush1.msra.mxu0 %v75
    %241 = vmatprep.subr.mxu0 0.0
    %242 = vmatpush1.msra.mxu0 %v76
    %243 = vmatprep.subr.mxu0 0.0
    %244 = vmatpush1.msra.mxu0 %v77
    %245 = vmatprep.subr.mxu0 0.0
    %246 = vmatpush1.msra.mxu0 %v78
    %247 = vmatprep.subr.mxu0 0.0
    %248 = vmatpush1.msra.mxu0 %v79
    %249 = vmatprep.mubr.f32.mxu0 %v161
    %250 = vmatmul.mubr.f32.gmra.mrb[0].mxu0 %v36
    %v251 = vpop.f32.mrb[0].mxu0
    %v252 = vadd.f32 %v183, %v251
    %v253 = vpop.f32.mrb[0].mxu0
    %254 = vmatprep.mubr.f32.mxu0 %v166
    %255 = vmatmul.mubr.f32.gmra.mrb[0].mxu0 %v37
    %v256 = vpop.f32.mrb[0].mxu0
    %v257 = vadd.f32 %v183, %v256
    %v258 = vpop.f32.mrb[0].mxu0
    %259 = vmatprep.mubr.f32.mxu0 %v171
    %260 = vmatmul.mubr.f32.gmra.mrb[0].mxu0 %v38
    %v261 = vpop.f32.mrb[0].mxu0
    %v262 = vadd.f32 %v183, %v261
    %v263 = vpop.f32.mrb[0].mxu0
    %264 = vmatprep.mubr.f32.mxu0 %v176
    %265 = vmatmul.mubr.f32.gmra.mrb[0].mxu0 %v39
    %v266 = vpop.f32.mrb[0].mxu0
    %v267 = vadd.f32 %v183, %v266
    %v268 = vpop.f32.mrb[0].mxu0
    %269 = vdwg.mxu0
    %v270 = vmax.f32 %v252, 0.0
    %v271 = vmax.f32 %v257, 0.0
    %v272 = vmax.f32 %v262, 0.0
    %v273 = vmax.f32 %v267, 0.0
    %v274 = vld [vmem:[%s4] sm:$0xff]
    %v275 = vld [vmem:[%s4 + $0x8] sm:$0xff]
    %v276 = vld [vmem:[%s5] sm:$0xff]
    %v277 = vld [vmem:[%s5 + $0x8] sm:$0xff]
    %v278 = vld [vmem:[%s5 + $0x10] sm:$0xff]
    %v279 = vld [vmem:[%s5 + $0x18] sm:$0xff]
    %v280 = vld [vmem:[%s5 + $0x20] sm:$0xff]
    %v281 = vld [vmem:[%s5 + $0x28] sm:$0xff]
    %v282 = vld [vmem:[%s5 + $0x30] sm:$0xff]
    %v283 = vld [vmem:[%s5 + $0x38] sm:$0xff]
    %v284 = vld [vmem:[%s5 + $0x40] sm:$0xff]
    %v285 = vld [vmem:[%s5 + $0x48] sm:$0xff]
    %v286 = vld [vmem:[%s5 + $0x50] sm:$0xff]
    %v287 = vld [vmem:[%s5 + $0x58] sm:$0xff]
    %v288 = vld [vmem:[%s5 + $0x60] sm:$0xff]
    %v289 = vld [vmem:[%s5 + $0x68] sm:$0xff]
    %v290 = vld [vmem:[%s5 + $0x70] sm:$0xff]
    %v291 = vld [vmem:[%s5 + $0x78] sm:$0xff]
    %v292 = vld [vmem:[%s5 + $0x80] sm:$0xff]
    %v293 = vld [vmem:[%s5 + $0x88] sm:$0xff]
    %v294 = vld [vmem:[%s5 + $0x90] sm:$0xff]
    %v295 = vld [vmem:[%s5 + $0x98] sm:$0xff]
    %v296 = vld [vmem:[%s5 + $0xa0] sm:$0xff]
    %v297 = vld [vmem:[%s5 + $0xa8] sm:$0xff]
    %v298 = vld [vmem:[%s5 + $0xb0] sm:$0xff]
    %v299 = vld [vmem:[%s5 + $0xb8] sm:$0xff]
    %v300 = vld [vmem:[%s5 + $0xc0] sm:$0xff]
    %v301 = vld [vmem:[%s5 + $0xc8] sm:$0xff]
    %v302 = vld [vmem:[%s5 + $0xd0] sm:$0xff]
    %v303 = vld [vmem:[%s5 + $0xd8] sm:$0xff]
    %v304 = vld [vmem:[%s5 + $0xe0] sm:$0xff]
    %v305 = vld [vmem:[%s5 + $0xe8] sm:$0xff]
    %v306 = vld [vmem:[%s5 + $0xf0] sm:$0xff]
    %v307 = vld [vmem:[%s5 + $0xf8] sm:$0xff]
    %v308 = vld [vmem:[%s6] sm:$0x1]
    %vm309 = vcmask 261120
    %v311 = vsel %vm309, %v274, 0
    %v314 = vsel %vm309, %v275, 0
    %316 = vmatprep.subr.mxu0 0.0
    %317 = vmatpush1.msra.mxu0 %v270
    %318 = vmatprep.subr.mxu0 0.0
    %319 = vmatpush1.msra.mxu0 %v271
    %320 = vmatprep.subr.mxu0 0.0
    %321 = vmatpush1.msra.mxu0 %v272
    %322 = vmatprep.subr.mxu0 0.0
    %323 = vmatpush1.msra.mxu0 %v273
    %324 = vmatprep.subr.mxu0 0.0
    %325 = vmatpush1.msra.mxu0 0.0
    %326 = vmatprep.subr.mxu0 0.0
    %327 = vmatpush1.msra.mxu0 0.0
    %328 = vmatprep.subr.mxu0 0.0
    %329 = vmatpush1.msra.mxu0 0.0
    %330 = vmatprep.subr.mxu0 0.0
    %331 = vmatpush1.msra.mxu0 0.0
    %332 = vmatprep.subr.mxu0 0.0
    %333 = vmatpush1.msra.mxu0 0.0
    %334 = vmatprep.subr.mxu0 0.0
    %335 = vmatpush1.msra.mxu0 0.0
    %336 = vmatprep.subr.mxu0 0.0
    %337 = vmatpush1.msra.mxu0 0.0
    %338 = vmatprep.subr.mxu0 0.0
    %339 = vmatpush1.msra.mxu0 0.0
    %340 = vmatprep.subr.mxu0 0.0
    %341 = vmatpush1.msra.mxu0 0.0
    %342 = vmatprep.subr.mxu0 0.0
    %343 = vmatpush1.msra.mxu0 0.0
    %344 = vmatprep.subr.mxu0 0.0
    %345 = vmatpush1.msra.mxu0 0.0
    %346 = vmatprep.subr.mxu0 0.0
    %347 = vmatpush1.msra.mxu0 0.0
    %348 = vmatprep.subr.mxu0 0.0
    %349 = vmatpush1.msra.mxu0 0.0
    %350 = vmatprep.subr.mxu0 0.0
    %351 = vmatpush1.msra.mxu0 0.0
    %352 = vmatprep.subr.mxu0 0.0
    %353 = vmatpush1.msra.mxu0 0.0
    %354 = vmatprep.subr.mxu0 0.0
    %355 = vmatpush1.msra.mxu0 0.0
    %356 = vmatprep.subr.mxu0 0.0
    %357 = vmatpush1.msra.mxu0 0.0
    %358 = vmatprep.subr.mxu0 0.0
    %359 = vmatpush1.msra.mxu0 0.0
    %360 = vmatprep.subr.mxu0 0.0
    %361 = vmatpush1.msra.mxu0 0.0
    %362 = vmatprep.subr.mxu0 0.0
    %363 = vmatpush1.msra.mxu0 0.0
    %364 = vmatprep.subr.mxu0 0.0
    %365 = vmatpush1.msra.mxu0 0.0
    %366 = vmatprep.subr.mxu0 0.0
    %367 = vmatpush1.msra.mxu0 0.0
    %368 = vmatprep.subr.mxu0 0.0
    %369 = vmatpush1.msra.mxu0 0.0
    %370 = vmatprep.subr.mxu0 0.0
    %371 = vmatpush1.msra.mxu0 0.0
    %372 = vmatprep.subr.mxu0 0.0
    %373 = vmatpush1.msra.mxu0 0.0
    %374 = vmatprep.subr.mxu0 0.0
    %375 = vmatpush1.msra.mxu0 0.0
    %376 = vmatprep.subr.mxu0 0.0
    %377 = vmatpush1.msra.mxu0 0.0
    %378 = vmatprep.subr.mxu0 0.0
    %379 = vmatpush1.msra.mxu0 0.0
    %380 = vmatprep.mubr.f32.mxu0 0.0
    %381 = vmatmul.mubr.f32.gmra.mrb[0].mxu0 %v311
    %v382 = vpop.f32.mrb[0].mxu0
    %v383 = vadd.f32 0.0, %v382
    %v384 = vpop.f32.mrb[0].mxu0
    %385 = vmatprep.mubr.f32.mxu0 0.0
    %386 = vmatmul.mubr.f32.gmra.mrb[0].mxu0 %v314
    %v387 = vpop.f32.mrb[0].mxu0
    %v388 = vadd.f32 0.0, %v387
    %v389 = vpop.f32.mrb[0].mxu0
    %390 = vdwg.mxu0
    %v392 = vlaneseq
    %v393 = vshrl.u32 %v392, 7
    %v394 = vsub.s32 0, %v393
    %v395 = vrot.slane %v308, %v394
    %397 = vmatprep.subr.mxu0 0.0
    %398 = vmatpush1.msra.mxu0 %v276
    %399 = vmatprep.subr.mxu0 0.0
    %400 = vmatpush1.msra.mxu0 %v277
    %401 = vmatprep.subr.mxu0 0.0
    %402 = vmatpush1.msra.mxu0 %v278
    %403 = vmatprep.subr.mxu0 0.0
    %404 = vmatpush1.msra.mxu0 %v279
    %405 = vmatprep.subr.mxu0 0.0
    %406 = vmatpush1.msra.mxu0 %v280
    %407 = vmatprep.subr.mxu0 0.0
    %408 = vmatpush1.msra.mxu0 %v281
    %409 = vmatprep.subr.mxu0 0.0
    %410 = vmatpush1.msra.mxu0 %v282
    %411 = vmatprep.subr.mxu0 0.0
    %412 = vmatpush1.msra.mxu0 %v283
    %413 = vmatprep.subr.mxu0 0.0
    %414 = vmatpush1.msra.mxu0 %v284
    %415 = vmatprep.subr.mxu0 0.0
    %416 = vmatpush1.msra.mxu0 %v285
    %417 = vmatprep.subr.mxu0 0.0
    %418 = vmatpush1.msra.mxu0 %v286
    %419 = vmatprep.subr.mxu0 0.0
    %420 = vmatpush1.msra.mxu0 %v287
    %421 = vmatprep.subr.mxu0 0.0
    %422 = vmatpush1.msra.mxu0 %v288
    %423 = vmatprep.subr.mxu0 0.0
    %424 = vmatpush1.msra.mxu0 %v289
    %425 = vmatprep.subr.mxu0 0.0
    %426 = vmatpush1.msra.mxu0 %v290
    %427 = vmatprep.subr.mxu0 0.0
    %428 = vmatpush1.msra.mxu0 %v291
    %429 = vmatprep.subr.mxu0 0.0
    %430 = vmatpush1.msra.mxu0 %v292
    %431 = vmatprep.subr.mxu0 0.0
    %432 = vmatpush1.msra.mxu0 %v293
    %433 = vmatprep.subr.mxu0 0.0
    %434 = vmatpush1.msra.mxu0 %v294
    %435 = vmatprep.subr.mxu0 0.0
    %436 = vmatpush1.msra.mxu0 %v295
    %437 = vmatprep.subr.mxu0 0.0
    %438 = vmatpush1.msra.mxu0 %v296
    %439 = vmatprep.subr.mxu0 0.0
    %440 = vmatpush1.msra.mxu0 %v297
    %441 = vmatprep.subr.mxu0 0.0
    %442 = vmatpush1.msra.mxu0 %v298
    %443 = vmatprep.subr.mxu0 0.0
    %444 = vmatpush1.msra.mxu0 %v299
    %445 = vmatprep.subr.mxu0 0.0
    %446 = vmatpush1.msra.mxu0 %v300
    %447 = vmatprep.subr.mxu0 0.0
    %448 = vmatpush1.msra.mxu0 %v301
    %449 = vmatprep.subr.mxu0 0.0
    %450 = vmatpush1.msra.mxu0 %v302
    %451 = vmatprep.subr.mxu0 0.0
    %452 = vmatpush1.msra.mxu0 %v303
    %453 = vmatprep.subr.mxu0 0.0
    %454 = vmatpush1.msra.mxu0 %v304
    %455 = vmatprep.subr.mxu0 0.0
    %456 = vmatpush1.msra.mxu0 %v305
    %457 = vmatprep.subr.mxu0 0.0
    %458 = vmatpush1.msra.mxu0 %v306
    %459 = vmatprep.subr.mxu0 0.0
    %460 = vmatpush1.msra.mxu0 %v307
    %461 = vmatprep.mubr.f32.mxu0 %v383
    %462 = vmatmul.mubr.f32.gmra.mrb[0].mxu0 %v270
    %v463 = vpop.f32.mrb[0].mxu0
    %v464 = vadd.f32 %v395, %v463
    %v465 = vpop.f32.mrb[0].mxu0
    %466 = vmatprep.mubr.f32.mxu0 %v388
    %467 = vmatmul.mubr.f32.gmra.mrb[0].mxu0 %v271
    %v468 = vpop.f32.mrb[0].mxu0
    %v469 = vadd.f32 %v395, %v468
    %v470 = vpop.f32.mrb[0].mxu0
    %471 = vdwg.mxu0
    %v472 = vmax.f32 %v464, 0.0
    %v473 = vmax.f32 %v469, 0.0
    %v474 = vld [vmem:[%s7] sm:$0xff]
    %v475 = vld [vmem:[%s8] sm:$0xff]
    %v476 = vld [vmem:[%s8 + $0x8] sm:$0xff]
    %v477 = vld [vmem:[%s8 + $0x10] sm:$0xff]
    %v478 = vld [vmem:[%s8 + $0x18] sm:$0xff]
    %v479 = vld [vmem:[%s8 + $0x20] sm:$0xff]
    %v480 = vld [vmem:[%s8 + $0x28] sm:$0xff]
    %v481 = vld [vmem:[%s8 + $0x30] sm:$0xff]
    %v482 = vld [vmem:[%s8 + $0x38] sm:$0xff]
    %v483 = vld [vmem:[%s8 + $0x40] sm:$0xff]
    %v484 = vld [vmem:[%s8 + $0x48] sm:$0xff]
    %v485 = vld [vmem:[%s8 + $0x50] sm:$0xff]
    %v486 = vld [vmem:[%s8 + $0x58] sm:$0xff]
    %v487 = vld [vmem:[%s8 + $0x60] sm:$0xff]
    %v488 = vld [vmem:[%s8 + $0x68] sm:$0xff]
    %v489 = vld [vmem:[%s8 + $0x70] sm:$0xff]
    %v490 = vld [vmem:[%s8 + $0x78] sm:$0xff]
    %v491 = vld [vmem:[%s8 + $0x80] sm:$0xff]
    %v492 = vld [vmem:[%s8 + $0x88] sm:$0xff]
    %v493 = vld [vmem:[%s8 + $0x90] sm:$0xff]
    %v494 = vld [vmem:[%s8 + $0x98] sm:$0xff]
    %v495 = vld [vmem:[%s8 + $0xa0] sm:$0xff]
    %v496 = vld [vmem:[%s8 + $0xa8] sm:$0xff]
    %v497 = vld [vmem:[%s8 + $0xb0] sm:$0xff]
    %v498 = vld [vmem:[%s8 + $0xb8] sm:$0xff]
    %v499 = vld [vmem:[%s8 + $0xc0] sm:$0xff]
    %v500 = vld [vmem:[%s8 + $0xc8] sm:$0xff]
    %v501 = vld [vmem:[%s8 + $0xd0] sm:$0xff]
    %v502 = vld [vmem:[%s8 + $0xd8] sm:$0xff]
    %v503 = vld [vmem:[%s8 + $0xe0] sm:$0xff]
    %v504 = vld [vmem:[%s8 + $0xe8] sm:$0xff]
    %v505 = vld [vmem:[%s8 + $0xf0] sm:$0xff]
    %v506 = vld [vmem:[%s8 + $0xf8] sm:$0xff]
    %v507 = vld [vmem:[%s9] sm:$0x1]
    %vm508 = vcmask 130048
    %v510 = vsel %vm508, %v474, 0
    %512 = vmatprep.subr.mxu0 0.0
    %513 = vmatpush1.msra.mxu0 %v472
    %514 = vmatprep.subr.mxu0 0.0
    %515 = vmatpush1.msra.mxu0 %v473
    %516 = vmatprep.subr.mxu0 0.0
    %517 = vmatpush1.msra.mxu0 0.0
    %518 = vmatprep.subr.mxu0 0.0
    %519 = vmatpush1.msra.mxu0 0.0
    %520 = vmatprep.subr.mxu0 0.0
    %521 = vmatpush1.msra.mxu0 0.0
    %522 = vmatprep.subr.mxu0 0.0
    %523 = vmatpush1.msra.mxu0 0.0
    %524 = vmatprep.subr.mxu0 0.0
    %525 = vmatpush1.msra.mxu0 0.0
    %526 = vmatprep.subr.mxu0 0.0
    %527 = vmatpush1.msra.mxu0 0.0
    %528 = vmatprep.subr.mxu0 0.0
    %529 = vmatpush1.msra.mxu0 0.0
    %530 = vmatprep.subr.mxu0 0.0
    %531 = vmatpush1.msra.mxu0 0.0
    %532 = vmatprep.subr.mxu0 0.0
    %533 = vmatpush1.msra.mxu0 0.0
    %534 = vmatprep.subr.mxu0 0.0
    %535 = vmatpush1.msra.mxu0 0.0
    %536 = vmatprep.subr.mxu0 0.0
    %537 = vmatpush1.msra.mxu0 0.0
    %538 = vmatprep.subr.mxu0 0.0
    %539 = vmatpush1.msra.mxu0 0.0
    %540 = vmatprep.subr.mxu0 0.0
    %541 = vmatpush1.msra.mxu0 0.0
    %542 = vmatprep.subr.mxu0 0.0
    %543 = vmatpush1.msra.mxu0 0.0
    %544 = vmatprep.subr.mxu0 0.0
    %545 = vmatpush1.msra.mxu0 0.0
    %546 = vmatprep.subr.mxu0 0.0
    %547 = vmatpush1.msra.mxu0 0.0
    %548 = vmatprep.subr.mxu0 0.0
    %549 = vmatpush1.msra.mxu0 0.0
    %550 = vmatprep.subr.mxu0 0.0
    %551 = vmatpush1.msra.mxu0 0.0
    %552 = vmatprep.subr.mxu0 0.0
    %553 = vmatpush1.msra.mxu0 0.0
    %554 = vmatprep.subr.mxu0 0.0
    %555 = vmatpush1.msra.mxu0 0.0
    %556 = vmatprep.subr.mxu0 0.0
    %557 = vmatpush1.msra.mxu0 0.0
    %558 = vmatprep.subr.mxu0 0.0
    %559 = vmatpush1.msra.mxu0 0.0
    %560 = vmatprep.subr.mxu0 0.0
    %561 = vmatpush1.msra.mxu0 0.0
    %562 = vmatprep.subr.mxu0 0.0
    %563 = vmatpush1.msra.mxu0 0.0
    %564 = vmatprep.subr.mxu0 0.0
    %565 = vmatpush1.msra.mxu0 0.0
    %566 = vmatprep.subr.mxu0 0.0
    %567 = vmatpush1.msra.mxu0 0.0
    %568 = vmatprep.subr.mxu0 0.0
    %569 = vmatpush1.msra.mxu0 0.0
    %570 = vmatprep.subr.mxu0 0.0
    %571 = vmatpush1.msra.mxu0 0.0
    %572 = vmatprep.subr.mxu0 0.0
    %573 = vmatpush1.msra.mxu0 0.0
    %574 = vmatprep.subr.mxu0 0.0
    %575 = vmatpush1.msra.mxu0 0.0
    %576 = vmatprep.mubr.f32.mxu0 0.0
    %577 = vmatmul.mubr.f32.gmra.mrb[0].mxu0 %v510
    %v578 = vpop.f32.mrb[0].mxu0
    %v579 = vadd.f32 0.0, %v578
    %v580 = vpop.f32.mrb[0].mxu0
    %581 = vdwg.mxu0
    %v583 = vlaneseq
    %v584 = vshrl.u32 %v583, 7
    %v585 = vsub.s32 0, %v584
    %v586 = vrot.slane %v507, %v585
    %588 = vmatprep.subr.mxu0 0.0
    %589 = vmatpush1.msra.mxu0 %v475
    %590 = vmatprep.subr.mxu0 0.0
    %591 = vmatpush1.msra.mxu0 %v476
    %592 = vmatprep.subr.mxu0 0.0
    %593 = vmatpush1.msra.mxu0 %v477
    %594 = vmatprep.subr.mxu0 0.0
    %595 = vmatpush1.msra.mxu0 %v478
    %596 = vmatprep.subr.mxu0 0.0
    %597 = vmatpush1.msra.mxu0 %v479
    %598 = vmatprep.subr.mxu0 0.0
    %599 = vmatpush1.msra.mxu0 %v480
    %600 = vmatprep.subr.mxu0 0.0
    %601 = vmatpush1.msra.mxu0 %v481
    %602 = vmatprep.subr.mxu0 0.0
    %603 = vmatpush1.msra.mxu0 %v482
    %604 = vmatprep.subr.mxu0 0.0
    %605 = vmatpush1.msra.mxu0 %v483
    %606 = vmatprep.subr.mxu0 0.0
    %607 = vmatpush1.msra.mxu0 %v484
    %608 = vmatprep.subr.mxu0 0.0
    %609 = vmatpush1.msra.mxu0 %v485
    %610 = vmatprep.subr.mxu0 0.0
    %611 = vmatpush1.msra.mxu0 %v486
    %612 = vmatprep.subr.mxu0 0.0
    %613 = vmatpush1.msra.mxu0 %v487
    %614 = vmatprep.subr.mxu0 0.0
    %615 = vmatpush1.msra.mxu0 %v488
    %616 = vmatprep.subr.mxu0 0.0
    %617 = vmatpush1.msra.mxu0 %v489
    %618 = vmatprep.subr.mxu0 0.0
    %619 = vmatpush1.msra.mxu0 %v490
    %620 = vmatprep.subr.mxu0 0.0
    %621 = vmatpush1.msra.mxu0 %v491
    %622 = vmatprep.subr.mxu0 0.0
    %623 = vmatpush1.msra.mxu0 %v492
    %624 = vmatprep.subr.mxu0 0.0
    %625 = vmatpush1.msra.mxu0 %v493
    %626 = vmatprep.subr.mxu0 0.0
    %627 = vmatpush1.msra.mxu0 %v494
    %628 = vmatprep.subr.mxu0 0.0
    %629 = vmatpush1.msra.mxu0 %v495
    %630 = vmatprep.subr.mxu0 0.0
    %631 = vmatpush1.msra.mxu0 %v496
    %632 = vmatprep.subr.mxu0 0.0
    %633 = vmatpush1.msra.mxu0 %v497
    %634 = vmatprep.subr.mxu0 0.0
    %635 = vmatpush1.msra.mxu0 %v498
    %636 = vmatprep.subr.mxu0 0.0
    %637 = vmatpush1.msra.mxu0 %v499
    %638 = vmatprep.subr.mxu0 0.0
    %639 = vmatpush1.msra.mxu0 %v500
    %640 = vmatprep.subr.mxu0 0.0
    %641 = vmatpush1.msra.mxu0 %v501
    %642 = vmatprep.subr.mxu0 0.0
    %643 = vmatpush1.msra.mxu0 %v502
    %644 = vmatprep.subr.mxu0 0.0
    %645 = vmatpush1.msra.mxu0 %v503
    %646 = vmatprep.subr.mxu0 0.0
    %647 = vmatpush1.msra.mxu0 %v504
    %648 = vmatprep.subr.mxu0 0.0
    %649 = vmatpush1.msra.mxu0 %v505
    %650 = vmatprep.subr.mxu0 0.0
    %651 = vmatpush1.msra.mxu0 %v506
    %652 = vmatprep.mubr.f32.mxu0 %v579
    %653 = vmatmul.mubr.f32.gmra.mrb[0].mxu0 %v472
    %v654 = vpop.f32.mrb[0].mxu0
    %v655 = vadd.f32 %v586, %v654
    %v656 = vpop.f32.mrb[0].mxu0
    %657 = vdwg.mxu0
    %658 = vst [vmem:[#allocation2] sm:$0xff] %v655
    // Predicated region
    $region42: #{sage_forward.1} parent=1 // pred_check
      _
    $region43: #{sage_forward.1} parent=1 // pred_check_branch
      %660 = sbr.rel (0) target = $region45
    $region44: #{sage_forward.1} parent=1 // pred_region
      %s662 = ssub.s32 128, 128
      %663 = vsyncadd [#allocation3], %s662
      %s665 = sshll.u32 [#allocation2], 4
      %s666 = int_to_ptr.vmem [resolvable:$true] %s665
      %668 = dma.vmem_to_hbm [thread:$0]  %s666, 128, %s10, [#allocation3]
    $region45: #{sage_forward.1} parent=1 // pred_fallthru
      _
    // Predicated region
    $region46: #{sage_forward.1} parent=1 // pred_check
      _
    $region47: #{sage_forward.1} parent=1 // pred_check_branch
      %670 = sbr.rel (0) target = $region49
    $region48: #{sage_forward.1} parent=1 // pred_region
      %671 = dma.done [#allocation3], 128
    $region49: #{sage_forward.1} parent=1 // pred_fallthru
      _
    %672 = vsyncpa [#allocation3], 1

</llo_original>
